<compile_context>
chip_gen: v6e
topology: v6e:2x2x1
jax: 0.10.0
libtpu: 0.0.40
codegen_flags: <defaults>
</compile_context>

<pallas_src>
import jax
import jax.numpy as jnp
from jax.experimental import pallas as pl
from jax.experimental.pallas import tpu as pltpu

BN_EPS = 1e-5


# --------------------------------------------------------------------------- #
# Kernel: one full micro-batch (train-mode BN over all rows of the block).
# --------------------------------------------------------------------------- #
def mlp_drift_kernel(t_ref, a_ref, w1_ref, w2_ref, vecs_ref, o_ref):
    """
    t_ref    : [B, 2*obs_dim]  f32        transition = cat([ot, delta_ot])
    a_ref    : [B, 1]          int32      discrete action ids
    w1_ref   : [K_pad, H]      f32/bf16   [w1_transition ; embed_table@w1_embed ; 0-pad]
    w2_ref   : [H, H]          f32/bf16
    vecs_ref : [8, H]          f32        rows: g1, be1, g2, be2, w3^T, b3@[5,0], 0, 0
    o_ref    : [B, 1]          f32
    """
    t = t_ref[...]
    a = a_ref[...]
    B, T = t.shape
    na_pad = w1_ref.shape[0] - T
    mm_dtype = w1_ref.dtype

    # ---- fc1: single fused matmul over [transition | onehot(action)] ----
    # (embedding lookup pre-folded: onehot @ (embed_table @ w1_embed)).
    onehot = (a == jax.lax.broadcasted_iota(jnp.int32, (B, na_pad), 1)
              ).astype(jnp.float32)
    x_aug = jnp.concatenate([t, onehot], axis=-1)                 # [B, K_pad] f32
    h = jnp.dot(x_aug.astype(mm_dtype), w1_ref[...],
                preferred_element_type=jnp.float32)               # [B, H] f32

    # ---- BN1 (train-mode batch stats, biased var; b1 exactly cancelled) + ReLU ----
    mu = jnp.mean(h, axis=0, keepdims=True)
    var = jnp.mean((h - mu) ** 2, axis=0, keepdims=True)
    scale = vecs_ref[0:1, :] * jax.lax.rsqrt(var + BN_EPS)
    h = jnp.maximum(h * scale + (vecs_ref[1:2, :] - mu * scale), 0.0)

    # ---- fc2 + BN2 + ReLU (b2 exactly cancelled by BN) ----
    h = jnp.dot(h.astype(mm_dtype), w2_ref[...],
                preferred_element_type=jnp.float32)
    mu = jnp.mean(h, axis=0, keepdims=True)
    var = jnp.mean((h - mu) ** 2, axis=0, keepdims=True)
    scale = vecs_ref[2:3, :] * jax.lax.rsqrt(var + BN_EPS)
    h = jnp.maximum(h * scale + (vecs_ref[3:4, :] - mu * scale), 0.0)

    # ---- fc3 as VPU multiply + XLU cross-lane reduce (no padded weight slab) ----
    w3_row = vecs_ref[4:5, :]                                     # [1, H]
    b3 = vecs_ref[5:6, 0:1]                                       # [1, 1]
    o_ref[...] = jnp.sum(h * w3_row, axis=-1, keepdims=True) + b3


# --------------------------------------------------------------------------- #
# Wrappers
# --------------------------------------------------------------------------- #
def mlp_drift_pallas(transition, action_i32, prepped):
    """Single micro-batch: no grid at all (everything is one full-array block)."""
    B = transition.shape[0]
    return pl.pallas_call(
        mlp_drift_kernel,
        out_shape=jax.ShapeDtypeStruct((B, 1), jnp.float32),
    )(transition, action_i32, prepped["w1_aug"], prepped["w2"], prepped["vecs"])


def mlp_drift_pallas_stacked(transition, action_i32, prepped):
    """N independent micro-batches: grid=(N,), weights VMEM-resident (constant
    index_map -> DMA'd once), streamed transition/action/output tiles.  Each grid
    step is one full BN batch, so train-mode statistics are unchanged."""
    N, B, T = transition.shape
    K = prepped["w1_aug"].shape[0]
    H = prepped["w2"].shape[0]
    in_specs = [
        pl.BlockSpec((None, B, T), lambda n: (n, 0, 0)),   # transition (streamed)
        pl.BlockSpec((None, B, 1), lambda n: (n, 0, 0)),   # action ids (streamed)
        pl.BlockSpec((K, H), lambda n: (0, 0)),            # w1_aug (resident)
        pl.BlockSpec((H, H), lambda n: (0, 0)),            # w2     (resident)
        pl.BlockSpec((8, H), lambda n: (0, 0)),            # packed vectors (resident)
    ]
    out_specs = pl.BlockSpec((None, B, 1), lambda n: (n, 0, 0))
    return pl.pallas_call(
        mlp_drift_kernel,
        out_shape=jax.ShapeDtypeStruct((N, B, 1), jnp.float32),
        grid=(N,),
        in_specs=in_specs,
        out_specs=out_specs,
        compiler_params=pltpu.CompilerParams(
            dimension_semantics=("parallel",)),   # sharded over v7x's 2 TCs
    )(transition, action_i32, prepped["w1_aug"], prepped["w2"], prepped["vecs"])


def mlp_drift_forward(x, prepped):
    """x: [B, 2*obs_dim + 1], last column = float-encoded discrete action id."""
    action = x[:, -1:].astype(jnp.int32)
    transition = x[:, :-1]
    return mlp_drift_pallas(transition, action, prepped)


def mlp_drift_forward_stacked(x_stack, prepped):
    """x_stack: [N, B, 2*obs_dim + 1] — N independent micro-batches."""
    action = x_stack[..., -1:].astype(jnp.int32)
    transition = x_stack[..., :-1]
    return mlp_drift_pallas_stacked(transition, action, prepped)


# --------------------------------------------------------------------------- #
# Parameters
# --------------------------------------------------------------------------- #
def init_params(key, obs_dim, num_actions, action_embed_dim, hidden_dim):
    """Parameters mirroring the PyTorch module (w stored as [in, out])."""
    d_in = 2 * obs_dim + action_embed_dim
    ks = jax.random.split(key, 8)
    s = 0.1
    params = {
        "w1": s * jax.random.normal(ks[0], (d_in, hidden_dim), jnp.float32),
        "b1": s * jax.random.normal(ks[1], (1, hidden_dim), jnp.float32),
        "g1": jnp.ones((1, hidden_dim), jnp.float32),
        "be1": jnp.zeros((1, hidden_dim), jnp.float32),
        "w2": s * jax.random.normal(ks[2], (hidden_dim, hidden_dim), jnp.float32),
        "b2": s * jax.random.normal(ks[3], (1, hidden_dim), jnp.float32),
        "g2": jnp.ones((1, hidden_dim), jnp.float32),
        "be2": jnp.zeros((1, hidden_dim), jnp.float32),
        "w3": s * jax.random.normal(ks[4], (hidden_dim, 1), jnp.float32),
        "b3": s * jax.random.normal(ks[5], (1, 1), jnp.float32),
    }
    embed_table = s * jax.random.normal(
        ks[6], (num_actions, action_embed_dim), jnp.float32)
    return params, embed_table, ks[7]


def prepare_params(params, embed_table, obs_dim, matmul_dtype=jnp.float32):
    """One-time pre-fold (outside the hot path):
       - w1 split; embedding half pre-multiplied by the embedding table and stacked
         under the transition half into a single w1_aug [K_pad, H] (K_pad % 8 == 0),
       - b1/b2 dropped (exactly cancelled by train-mode BN mean subtraction),
       - g1/be1/g2/be2/w3^T/b3 packed into one [8, H] slab (one DMA),
       - optional bf16 storage for the MXU operands (v6e/v7x)."""
    T = 2 * obs_dim
    num_actions, _ = embed_table.shape
    H = params["w2"].shape[0]
    K_pad = ((T + num_actions + 7) // 8) * 8

    w1_t = params["w1"][:T, :]                      # [2*obs_dim, H]
    w1_e = params["w1"][T:, :]                      # [embed_dim, H]
    folded = jnp.dot(embed_table, w1_e)             # [num_actions, H]
    w1_aug = jnp.zeros((K_pad, H), jnp.float32)
    w1_aug = w1_aug.at[:T, :].set(w1_t).at[T:T + num_actions, :].set(folded)

    vecs = jnp.zeros((8, H), jnp.float32)
    vecs = (vecs.at[0].set(params["g1"][0])
                .at[1].set(params["be1"][0])
                .at[2].set(params["g2"][0])
                .at[3].set(params["be2"][0])
                .at[4].set(params["w3"][:, 0])
                .at[5, 0].set(params["b3"][0, 0]))

    return {
        "w1_aug": w1_aug.astype(matmul_dtype),
        "w2": params["w2"].astype(matmul_dtype),
        "vecs": vecs,
    }


# --------------------------------------------------------------------------- #
# Pure-JAX reference (mirrors the PyTorch forward exactly, f32)
# --------------------------------------------------------------------------- #
def _bn_relu(h, g, b):
    mu = jnp.mean(h, axis=0, keepdims=True)
    var = jnp.mean((h - mu) ** 2, axis=0, keepdims=True)
    return jnp.maximum((h - mu) * jax.lax.rsqrt(var + BN_EPS) * g + b, 0.0)


def reference_forward(x, params, embed_table):
    action = x[:, -1:]
    transition = x[:, :-1]
    a = action[:, 0].astype(jnp.int32)
    emb = embed_table[a]
    xin = jnp.concatenate([transition, emb], axis=-1)
    h = _bn_relu(xin @ params["w1"] + params["b1"], params["g1"], params["be1"])
    h = _bn_relu(h @ params["w2"] + params["b2"], params["g2"], params["be2"])
    return h @ params["w3"] + params["b3"]


# --------------------------------------------------------------------------- #
if __name__ == "__main__":
    obs_dim = 16
    num_actions = 4
    action_embed_dim = 8
    hidden_dim = 128        # multiple of 128 -> full lane utilization
    batch = 8               # one BN micro-batch
    n_stack = 4             # independent micro-batches for the resident-weight grid

    key = jax.random.PRNGKey(0)
    params, embed_table, key = init_params(
        key, obs_dim, num_actions, action_embed_dim, hidden_dim)
    prepped = prepare_params(params, embed_table, obs_dim)

    k_obs, k_act = jax.random.split(key)
    transition = jax.random.normal(k_obs, (n_stack, batch, 2 * obs_dim), jnp.float32)
    action_ids = jax.random.randint(
        k_act, (n_stack, batch, 1), 0, num_actions).astype(jnp.float32)
    x_stack = jnp.concatenate([transition, action_ids], axis=-1)   # [N, B, 2*obs+1]

    # Single micro-batch (no grid).
    out_single = mlp_drift_forward(x_stack[0], prepped)
    # Stacked micro-batches (grid over N, weights DMA'd once, parallel axis).
    out_stack = mlp_drift_forward_stacked(x_stack, prepped)
    jax.block_until_ready((out_single, out_stack))

    assert out_single.shape == (batch, 1)
    assert out_stack.shape == (n_stack, batch, 1)

    ref_single = reference_forward(x_stack[0], params, embed_table)
    ref_stack = jax.vmap(lambda xi: reference_forward(xi, params, embed_table))(x_stack)
    assert jnp.allclose(out_single, ref_single, atol=1e-4, rtol=1e-4)
    assert jnp.allclose(out_stack, ref_stack, atol=1e-4, rtol=1e-4)

    # bf16 MXU-operand variant (v6e/v7x DMA + MXU win; BN math stays f32).
    prepped_bf16 = prepare_params(params, embed_table, obs_dim,
                                  matmul_dtype=jnp.bfloat16)
    out_bf16 = mlp_drift_forward_stacked(x_stack, prepped_bf16)
    jax.block_until_ready(out_bf16)
    assert out_bf16.shape == (n_stack, batch, 1)

    print("KERNEL_OK")
</pallas_src>

<mosaic_0001>
module attributes {stable_mosaic.version = 11 : i64} {
  func.func @mlp_drift_kernel(%arg0: memref<8x32xf32, #tpu.memory_space<vmem>>, %arg1: memref<8x1xi32, #tpu.memory_space<vmem>>, %arg2: memref<40x128xf32, #tpu.memory_space<vmem>>, %arg3: memref<128x128xf32, #tpu.memory_space<vmem>>, %arg4: memref<8x128xf32, #tpu.memory_space<vmem>>, %arg5: memref<8x1xf32, #tpu.memory_space<vmem>>) attributes {dimension_semantics = [], scalar_prefetch = 0 : i64, scratch_operands = 0 : i64, tpu.core_type = #tpu.core_type<tc>} {
    %c0 = arith.constant 0 : index
    %c0_0 = arith.constant 0 : index
    %0 = vector.load %arg0[%c0, %c0_0] : memref<8x32xf32, #tpu.memory_space<vmem>>, vector<8x32xf32>
    %c0_1 = arith.constant 0 : index
    %c0_2 = arith.constant 0 : index
    %1 = vector.load %arg1[%c0_1, %c0_2] : memref<8x1xi32, #tpu.memory_space<vmem>>, vector<8x1xi32>
    %2 = tpu.iota {dimensions = array<i32: 1>} : vector<8x8xi32>
    %3 = vector.broadcast %1 : vector<8x1xi32> to vector<8x8xi32>
    %4 = arith.cmpi eq, %3, %2 : vector<8x8xi32>
    %5 = arith.extui %4 : vector<8x8xi1> to vector<8x8xi32>
    %6 = arith.sitofp %5 : vector<8x8xi32> to vector<8x8xf32>
    %7 = tpu.concatenate %0, %6 in 1 : vector<8x32xf32>, vector<8x8xf32> -> vector<8x40xf32>
    %c0_3 = arith.constant 0 : index
    %c0_4 = arith.constant 0 : index
    %8 = vector.load %arg2[%c0_3, %c0_4] : memref<40x128xf32, #tpu.memory_space<vmem>>, vector<40x128xf32>
    %cst = arith.constant dense<0.000000e+00> : vector<8x128xf32>
    %9 = tpu.matmul %7, %8, %cst {dimension_numbers = #tpu.dot_dimension_numbers<[1], [0], [0], [1], [0, 0, 1, 1], [], []>} : vector<8x40xf32>, vector<40x128xf32>, vector<8x128xf32> -> vector<8x128xf32>
    %cst_5 = arith.constant dense<0.000000e+00> : vector<128xf32>
    %10 = vector.multi_reduction <add>, %9, %cst_5 [0] : vector<8x128xf32> to vector<128xf32>
    %11 = vector.shape_cast %10 : vector<128xf32> to vector<1x128xf32>
    %cst_6 = arith.constant 8.000000e+00 : f32
    %12 = vector.broadcast %cst_6 : f32 to vector<1x128xf32>
    %13 = arith.divf %11, %12 : vector<1x128xf32>
    %14 = vector.broadcast %13 : vector<1x128xf32> to vector<8x128xf32>
    %15 = arith.subf %9, %14 : vector<8x128xf32>
    %16 = arith.mulf %15, %15 : vector<8x128xf32>
    %cst_7 = arith.constant dense<0.000000e+00> : vector<128xf32>
    %17 = vector.multi_reduction <add>, %16, %cst_7 [0] : vector<8x128xf32> to vector<128xf32>
    %18 = vector.shape_cast %17 : vector<128xf32> to vector<1x128xf32>
    %cst_8 = arith.constant 8.000000e+00 : f32
    %19 = vector.broadcast %cst_8 : f32 to vector<1x128xf32>
    %20 = arith.divf %18, %19 : vector<1x128xf32>
    %c0_9 = arith.constant 0 : index
    %c0_10 = arith.constant 0 : index
    %21 = vector.load %arg4[%c0_9, %c0_10] : memref<8x128xf32, #tpu.memory_space<vmem>>, vector<1x128xf32>
    %cst_11 = arith.constant 9.99999974E-6 : f32
    %22 = vector.broadcast %cst_11 : f32 to vector<1x128xf32>
    %23 = arith.addf %20, %22 : vector<1x128xf32>
    %24 = math.rsqrt %23 : vector<1x128xf32>
    %25 = arith.mulf %21, %24 : vector<1x128xf32>
    %26 = vector.broadcast %25 : vector<1x128xf32> to vector<8x128xf32>
    %27 = arith.mulf %9, %26 : vector<8x128xf32>
    %c1 = arith.constant 1 : index
    %c0_12 = arith.constant 0 : index
    %28 = vector.load %arg4[%c1, %c0_12] : memref<8x128xf32, #tpu.memory_space<vmem>>, vector<1x128xf32>
    %29 = arith.mulf %13, %25 : vector<1x128xf32>
    %30 = arith.subf %28, %29 : vector<1x128xf32>
    %31 = vector.broadcast %30 : vector<1x128xf32> to vector<8x128xf32>
    %32 = arith.addf %27, %31 : vector<8x128xf32>
    %cst_13 = arith.constant 0.000000e+00 : f32
    %33 = vector.broadcast %cst_13 : f32 to vector<8x128xf32>
    %34 = arith.maximumf %32, %33 : vector<8x128xf32>
    %c0_14 = arith.constant 0 : index
    %c0_15 = arith.constant 0 : index
    %35 = vector.load %arg3[%c0_14, %c0_15] : memref<128x128xf32, #tpu.memory_space<vmem>>, vector<128x128xf32>
    %cst_16 = arith.constant dense<0.000000e+00> : vector<8x128xf32>
    %36 = tpu.matmul %34, %35, %cst_16 {dimension_numbers = #tpu.dot_dimension_numbers<[1], [0], [0], [1], [0, 0, 1, 1], [], []>} : vector<8x128xf32>, vector<128x128xf32>, vector<8x128xf32> -> vector<8x128xf32>
    %cst_17 = arith.constant dense<0.000000e+00> : vector<128xf32>
    %37 = vector.multi_reduction <add>, %36, %cst_17 [0] : vector<8x128xf32> to vector<128xf32>
    %38 = vector.shape_cast %37 : vector<128xf32> to vector<1x128xf32>
    %cst_18 = arith.constant 8.000000e+00 : f32
    %39 = vector.broadcast %cst_18 : f32 to vector<1x128xf32>
    %40 = arith.divf %38, %39 : vector<1x128xf32>
    %41 = vector.broadcast %40 : vector<1x128xf32> to vector<8x128xf32>
    %42 = arith.subf %36, %41 : vector<8x128xf32>
    %43 = arith.mulf %42, %42 : vector<8x128xf32>
    %cst_19 = arith.constant dense<0.000000e+00> : vector<128xf32>
    %44 = vector.multi_reduction <add>, %43, %cst_19 [0] : vector<8x128xf32> to vector<128xf32>
    %45 = vector.shape_cast %44 : vector<128xf32> to vector<1x128xf32>
    %cst_20 = arith.constant 8.000000e+00 : f32
    %46 = vector.broadcast %cst_20 : f32 to vector<1x128xf32>
    %47 = arith.divf %45, %46 : vector<1x128xf32>
    %c2 = arith.constant 2 : index
    %c0_21 = arith.constant 0 : index
    %48 = vector.load %arg4[%c2, %c0_21] : memref<8x128xf32, #tpu.memory_space<vmem>>, vector<1x128xf32>
    %cst_22 = arith.constant 9.99999974E-6 : f32
    %49 = vector.broadcast %cst_22 : f32 to vector<1x128xf32>
    %50 = arith.addf %47, %49 : vector<1x128xf32>
    %51 = math.rsqrt %50 : vector<1x128xf32>
    %52 = arith.mulf %48, %51 : vector<1x128xf32>
    %53 = vector.broadcast %52 : vector<1x128xf32> to vector<8x128xf32>
    %54 = arith.mulf %36, %53 : vector<8x128xf32>
    %c3 = arith.constant 3 : index
    %c0_23 = arith.constant 0 : index
    %55 = vector.load %arg4[%c3, %c0_23] : memref<8x128xf32, #tpu.memory_space<vmem>>, vector<1x128xf32>
    %56 = arith.mulf %40, %52 : vector<1x128xf32>
    %57 = arith.subf %55, %56 : vector<1x128xf32>
    %58 = vector.broadcast %57 : vector<1x128xf32> to vector<8x128xf32>
    %59 = arith.addf %54, %58 : vector<8x128xf32>
    %cst_24 = arith.constant 0.000000e+00 : f32
    %60 = vector.broadcast %cst_24 : f32 to vector<8x128xf32>
    %61 = arith.maximumf %59, %60 : vector<8x128xf32>
    %c4 = arith.constant 4 : index
    %c0_25 = arith.constant 0 : index
    %62 = vector.load %arg4[%c4, %c0_25] : memref<8x128xf32, #tpu.memory_space<vmem>>, vector<1x128xf32>
    %c5 = arith.constant 5 : index
    %c0_26 = arith.constant 0 : index
    %63 = vector.load %arg4[%c5, %c0_26] : memref<8x128xf32, #tpu.memory_space<vmem>>, vector<1x1xf32>
    %64 = vector.broadcast %62 : vector<1x128xf32> to vector<8x128xf32>
    %65 = arith.mulf %61, %64 : vector<8x128xf32>
    %cst_27 = arith.constant dense<0.000000e+00> : vector<8xf32>
    %66 = vector.multi_reduction <add>, %65, %cst_27 [1] : vector<8x128xf32> to vector<8xf32>
    %67 = vector.shape_cast %66 : vector<8xf32> to vector<8x1xf32>
    %68 = vector.broadcast %63 : vector<1x1xf32> to vector<8x1xf32>
    %69 = arith.addf %67, %68 : vector<8x1xf32>
    %c0_28 = arith.constant 0 : index
    %c0_29 = arith.constant 0 : index
    %70 = vector.load %arg5[%c0_28, %c0_29] : memref<8x1xf32, #tpu.memory_space<vmem>>, vector<8x1xf32>
    tpu.vector_store %arg5[%c0_28, %c0_29], %69 {strides = array<i32>} : memref<8x1xf32, #tpu.memory_space<vmem>>, vector<8x1xf32>,
    return
  }
}

</mosaic_0001>

<llo_original>
// kernel: tpu_custom_call.1
$region0: #{tpu_custom_call.1}
  #allocation0 [shape = 'u32[]', space=smem, size = 0x4, offset = 0x4, fixed_abs, tag = 'smem constant byte address 0x4 - core index']
  #allocation1 [shape = 'u32[144,128]{1,0:T(1,128)}', space=vmem, size = 0x12000, scoped, tag = 'internal scratch']
  %s0 = inlined_call_operand.vmem [shape: f32[8,32], index: 0, kind: input, shape index: {}]
  %s1 = inlined_call_operand.vmem [shape: s32[8,1], index: 1, kind: input, shape index: {}]
  %s2 = inlined_call_operand.hbm [shape: f32[40,128], index: 2, kind: input, shape index: {}]
  %s3 = inlined_call_operand.hbm [shape: f32[128,128], index: 3, kind: input, shape index: {}]
  %s4 = inlined_call_operand.vmem [shape: f32[8,128], index: 4, kind: input, shape index: {}]
  %s5 = inlined_call_operand.vmem [shape: f32[8,1], index: 5, kind: output, shape index: {}]
  %s6 = sld [smem:[#allocation0]]
  $region38: #{tpu_custom_call.1} parent=0
    _
  %s8 = ssub.s32 1, %s6
  %s9 = scalar_select 0, %s8, %s6
  $region1: #{tpu_custom_call.1} parent=0
    #allocation2 [shape = 'u8[20480]{0}', space=vmem, size = 0x5000, scoped, tag = 'input window, operand 2, single buffered']
    #allocation3 [shape = 's32[1]{0}', space=sflag, size = 0x4, scoped, tag = 'scoped memory for tpu_custom_call.1']
    #allocation4 [shape = 'u8[65536]{0}', space=vmem, size = 0x10000, scoped, tag = 'input window, operand 3, single buffered']
    #allocation5 [shape = 's32[1]{0}', space=sflag, size = 0x4, scoped, tag = 'scoped memory for tpu_custom_call.1']
    %10 = vsyncpa [#allocation3], 0
    %11 = vsyncpa [#allocation5], 0
    // Predicated region
    $region2: #{tpu_custom_call.1} parent=1 // pred_check
      _
    $region3: #{tpu_custom_call.1} parent=1 // pred_check_branch
      %13 = sbr.rel (0) target = $region5
    $region4: #{tpu_custom_call.1} parent=1 // pred_region
      _
    $region5: #{tpu_custom_call.1} parent=1 // pred_fallthru
      _
    // Predicated region
    $region6: #{tpu_custom_call.1} parent=1 // pred_check
      _
    $region7: #{tpu_custom_call.1} parent=1 // pred_check_branch
      %15 = sbr.rel (0) target = $region9
    $region8: #{tpu_custom_call.1} parent=1 // pred_region
      _
    $region9: #{tpu_custom_call.1} parent=1 // pred_fallthru
      _
    // Predicated region
    $region10: #{tpu_custom_call.1} parent=1 // pred_check
      _
    $region11: #{tpu_custom_call.1} parent=1 // pred_check_branch
      %17 = sbr.rel (0) target = $region13
    $region12: #{tpu_custom_call.1} parent=1 // pred_region
      %s19 = ssub.s32 640, 640
      %20 = vsyncadd [#allocation3], %s19
      %s21 = sshll.u32 [#allocation2], 4
      %s22 = int_to_ptr.vmem [resolvable:$true] %s21
      %27 = dma.hbm_to_vmem [thread:$0]  %s2, 640, %s22, [#allocation3], 128, 128, 8
    $region13: #{tpu_custom_call.1} parent=1 // pred_fallthru
      _
    // Predicated region
    $region14: #{tpu_custom_call.1} parent=1 // pred_check
      _
    $region15: #{tpu_custom_call.1} parent=1 // pred_check_branch
      %29 = sbr.rel (0) target = $region17
    $region16: #{tpu_custom_call.1} parent=1 // pred_region
      %s31 = ssub.s32 2048, 2048
      %32 = vsyncadd [#allocation5], %s31
      %s33 = sshll.u32 [#allocation4], 4
      %s34 = int_to_ptr.vmem [resolvable:$true] %s33
      %39 = dma.hbm_to_vmem [thread:$0]  %s3, 2048, %s34, [#allocation5], 128, 128, 8
    $region17: #{tpu_custom_call.1} parent=1 // pred_fallthru
      _
    // Predicated region
    $region18: #{tpu_custom_call.1} parent=1 // pred_check
      _
    $region19: #{tpu_custom_call.1} parent=1 // pred_check_branch
      %41 = sbr.rel (0) target = $region21
    $region20: #{tpu_custom_call.1} parent=1 // pred_region
      _
    $region21: #{tpu_custom_call.1} parent=1 // pred_fallthru
      _
    // Predicated region
    $region22: #{tpu_custom_call.1} parent=1 // pred_check
      _
    $region23: #{tpu_custom_call.1} parent=1 // pred_check_branch
      %43 = sbr.rel (0) target = $region25
    $region24: #{tpu_custom_call.1} parent=1 // pred_region
      %44 = dma.done [#allocation3], 640
    $region25: #{tpu_custom_call.1} parent=1 // pred_fallthru
      _
    // Predicated region
    $region26: #{tpu_custom_call.1} parent=1 // pred_check
      _
    $region27: #{tpu_custom_call.1} parent=1 // pred_check_branch
      %46 = sbr.rel (0) target = $region29
    $region28: #{tpu_custom_call.1} parent=1 // pred_region
      %47 = dma.done [#allocation5], 2048
    $region29: #{tpu_custom_call.1} parent=1 // pred_fallthru
      _
    %v48 = vld [vmem:[%s0] sm:$0xff]
    %v49 = vld [vmem:[%s1] sm:$0xff]
    %v50 = vlaneseq
    %v51 = vand.u32 %v50, 127
    %52 = vset.pattern.permute.xlu0 0
    %53 = vperm.xlu0 %52, %v49
    %v54 = vpop.permute.xlu0 %53
    %vm55 = vcmp.eq.s32.totalorder %v54, %v51
    %v56 = vsel %vm55, 1, 0
    %v57 = vcvt.s32.f32 %v56
    %59 = vrot.lane.b32.xlu0 %v57, 32
    %v60 = vpop.permute.xlu0 %59
    %vm62 = vcmask 261120
    %v63 = vsel %vm62, %v48, %v60
    %v64 = vld [vmem:[#allocation2] sm:$0xff]
    %v65 = vld [vmem:[#allocation2 + $0x8] sm:$0xff]
    %v66 = vld [vmem:[#allocation2 + $0x10] sm:$0xff]
    %v67 = vld [vmem:[#allocation2 + $0x18] sm:$0xff]
    %v68 = vld [vmem:[#allocation2 + $0x20] sm:$0xff]
    %vm69 = vcmask 326656
    %v71 = vsel %vm69, %v63, 0
    %73 = vmatprep.subr.mxu0 0.0
    %74 = vmatpush1.msra.mxu0 0.0
    %75 = vmatprep.subr.mxu0 0.0
    %76 = vmatpush1.msra.mxu0 0.0
    %77 = vmatprep.subr.mxu0 0.0
    %78 = vmatpush1.msra.mxu0 0.0
    %79 = vmatprep.subr.mxu0 0.0
    %80 = vmatpush1.msra.mxu0 0.0
    %81 = vmatprep.subr.mxu0 0.0
    %82 = vmatpush1.msra.mxu0 0.0
    %83 = vmatprep.subr.mxu0 0.0
    %84 = vmatpush1.msra.mxu0 0.0
    %85 = vmatprep.subr.mxu0 0.0
    %86 = vmatpush1.msra.mxu0 0.0
    %87 = vmatprep.subr.mxu0 0.0
    %88 = vmatpush1.msra.mxu0 0.0
    %89 = vmatprep.subr.mxu0 0.0
    %90 = vmatpush1.msra.mxu0 0.0
    %91 = vmatprep.subr.mxu0 0.0
    %92 = vmatpush1.msra.mxu0 0.0
    %93 = vmatprep.subr.mxu0 0.0
    %94 = vmatpush1.msra.mxu0 0.0
    %95 = vmatprep.subr.mxu0 0.0
    %96 = vmatpush1.msra.mxu0 %v68
    %97 = vmatprep.subr.mxu0 0.0
    %98 = vmatpush1.msra.mxu0 %v67
    %99 = vmatprep.subr.mxu0 0.0
    %100 = vmatpush1.msra.mxu0 %v66
    %101 = vmatprep.subr.mxu0 0.0
    %102 = vmatpush1.msra.mxu0 %v65
    %103 = vmatprep.subr.mxu0 0.0
    %104 = vmatpush1.msra.mxu0 %v64
    %105 = vmatprep.subr.mxu0 0.0
    %106 = vmatpush2.msra.mxu0 0.0
    %107 = vmatprep.subr.mxu0 0.0
    %108 = vmatpush2.msra.mxu0 0.0
    %109 = vmatprep.subr.mxu0 0.0
    %110 = vmatpush2.msra.mxu0 0.0
    %111 = vmatprep.subr.mxu0 0.0
    %112 = vmatpush2.msra.mxu0 0.0
    %113 = vmatprep.subr.mxu0 0.0
    %114 = vmatpush2.msra.mxu0 0.0
    %115 = vmatprep.subr.mxu0 0.0
    %116 = vmatpush2.msra.mxu0 0.0
    %117 = vmatprep.subr.mxu0 0.0
    %118 = vmatpush2.msra.mxu0 0.0
    %119 = vmatprep.subr.mxu0 0.0
    %120 = vmatpush2.msra.mxu0 0.0
    %121 = vmatprep.subr.mxu0 0.0
    %122 = vmatpush2.msra.mxu0 0.0
    %123 = vmatprep.subr.mxu0 0.0
    %124 = vmatpush2.msra.mxu0 0.0
    %125 = vmatprep.subr.mxu0 0.0
    %126 = vmatpush2.msra.mxu0 0.0
    %127 = vmatprep.subr.mxu0 0.0
    %128 = vmatpush2.msra.mxu0 0.0
    %129 = vmatprep.subr.mxu0 0.0
    %130 = vmatpush2.msra.mxu0 0.0
    %131 = vmatprep.subr.mxu0 0.0
    %132 = vmatpush2.msra.mxu0 0.0
    %133 = vmatprep.subr.mxu0 0.0
    %134 = vmatpush2.msra.mxu0 0.0
    %135 = vmatprep.subr.mxu0 0.0
    %136 = vmatpush2.msra.mxu0 0.0
    %137 = vmatprep.mubr.f32.mxu0 0.0
    %138 = vmatmul.mubr.f32.gmra.mxu0 %v71
    %v139 = vpop.f32.mrf.mxu0
    %v140 = vadd.f32 0.0, %v139
    %v141 = vpop.f32.mrf.mxu0
    %142 = vdwg.mxu0
    %v143 = vrot.slane %v140, 4
    %v144 = vadd.f32 %v140, %v143
    %v145 = vrot.slane %v144, 2
    %v146 = vadd.f32 %v144, %v145
    %v147 = vrot.slane %v146, 1
    %v148 = vadd.f32 %v146, %v147
    %v149 = vrcp.pop 8.0
    %v150 = vmul.f32 %v148, %v149
    %v151 = vsub.f32 %v140, %v150
    %v152 = vmul.f32 %v151, %v151
    %v153 = vrot.slane %v152, 4
    %v154 = vadd.f32 %v152, %v153
    %v155 = vrot.slane %v154, 2
    %v156 = vadd.f32 %v154, %v155
    %v157 = vrot.slane %v156, 1
    %v158 = vadd.f32 %v156, %v157
    %v159 = vmul.f32 %v158, %v149
    %v160 = vld [vmem:[%s4] sm:$0x1]
    %v161 = vadd.f32 %v159, 1e-05
    %v162 = vrsqrt.pop %v161
    %v163 = vmul.f32 %v160, %v162
    %v164 = vlaneseq
    %v165 = vshrl.u32 %v164, 7
    %v166 = vsub.s32 0, %v165
    %v167 = vrot.slane %v163, %v166
    %v168 = vmul.f32 %v140, %v167
    %v169 = vld [vmem:[%s4 + $0x1] sm:$0x1]
    %v170 = vmul.f32 %v150, %v163
    %v171 = vsub.f32 %v169, %v170
    %v172 = vlaneseq
    %v173 = vshrl.u32 %v172, 7
    %v174 = vsub.s32 0, %v173
    %v175 = vrot.slane %v171, %v174
    %v176 = vadd.f32 %v168, %v175
    %v177 = vmax.f32 %v176, 0.0
    %v178 = vld [vmem:[#allocation4] sm:$0xff]
    %v179 = vld [vmem:[#allocation4 + $0x8] sm:$0xff]
    %v180 = vld [vmem:[#allocation4 + $0x10] sm:$0xff]
    %v181 = vld [vmem:[#allocation4 + $0x18] sm:$0xff]
    %v182 = vld [vmem:[#allocation4 + $0x20] sm:$0xff]
    %v183 = vld [vmem:[#allocation4 + $0x28] sm:$0xff]
    %v184 = vld [vmem:[#allocation4 + $0x30] sm:$0xff]
    %v185 = vld [vmem:[#allocation4 + $0x38] sm:$0xff]
    %v186 = vld [vmem:[#allocation4 + $0x40] sm:$0xff]
    %v187 = vld [vmem:[#allocation4 + $0x48] sm:$0xff]
    %v188 = vld [vmem:[#allocation4 + $0x50] sm:$0xff]
    %v189 = vld [vmem:[#allocation4 + $0x58] sm:$0xff]
    %v190 = vld [vmem:[#allocation4 + $0x60] sm:$0xff]
    %v191 = vld [vmem:[#allocation4 + $0x68] sm:$0xff]
    %v192 = vld [vmem:[#allocation4 + $0x70] sm:$0xff]
    %v193 = vld [vmem:[#allocation4 + $0x78] sm:$0xff]
    %194 = vmatprep.subr.mxu0 0.0
    %195 = vmatpush1.msra.mxu0 %v193
    %196 = vmatprep.subr.mxu0 0.0
    %197 = vmatpush1.msra.mxu0 %v192
    %198 = vmatprep.subr.mxu0 0.0
    %199 = vmatpush1.msra.mxu0 %v191
    %200 = vmatprep.subr.mxu0 0.0
    %201 = vmatpush1.msra.mxu0 %v190
    %202 = vmatprep.subr.mxu0 0.0
    %203 = vmatpush1.msra.mxu0 %v189
    %204 = vmatprep.subr.mxu0 0.0
    %205 = vmatpush1.msra.mxu0 %v188
    %206 = vmatprep.subr.mxu0 0.0
    %207 = vmatpush1.msra.mxu0 %v187
    %208 = vmatprep.subr.mxu0 0.0
    %209 = vmatpush1.msra.mxu0 %v186
    %210 = vmatprep.subr.mxu0 0.0
    %211 = vmatpush1.msra.mxu0 %v185
    %212 = vmatprep.subr.mxu0 0.0
    %213 = vmatpush1.msra.mxu0 %v184
    %214 = vmatprep.subr.mxu0 0.0
    %215 = vmatpush1.msra.mxu0 %v183
    %216 = vmatprep.subr.mxu0 0.0
    %217 = vmatpush1.msra.mxu0 %v182
    %218 = vmatprep.subr.mxu0 0.0
    %219 = vmatpush1.msra.mxu0 %v181
    %220 = vmatprep.subr.mxu0 0.0
    %221 = vmatpush1.msra.mxu0 %v180
    %222 = vmatprep.subr.mxu0 0.0
    %223 = vmatpush1.msra.mxu0 %v179
    %224 = vmatprep.subr.mxu0 0.0
    %225 = vmatpush1.msra.mxu0 %v178
    %226 = vmatprep.subr.mxu0 0.0
    %227 = vmatpush2.msra.mxu0 0.0
    %228 = vmatprep.subr.mxu0 0.0
    %229 = vmatpush2.msra.mxu0 0.0
    %230 = vmatprep.subr.mxu0 0.0
    %231 = vmatpush2.msra.mxu0 0.0
    %232 = vmatprep.subr.mxu0 0.0
    %233 = vmatpush2.msra.mxu0 0.0
    %234 = vmatprep.subr.mxu0 0.0
    %235 = vmatpush2.msra.mxu0 0.0
    %236 = vmatprep.subr.mxu0 0.0
    %237 = vmatpush2.msra.mxu0 0.0
    %238 = vmatprep.subr.mxu0 0.0
    %239 = vmatpush2.msra.mxu0 0.0
    %240 = vmatprep.subr.mxu0 0.0
    %241 = vmatpush2.msra.mxu0 0.0
    %242 = vmatprep.subr.mxu0 0.0
    %243 = vmatpush2.msra.mxu0 0.0
    %244 = vmatprep.subr.mxu0 0.0
    %245 = vmatpush2.msra.mxu0 0.0
    %246 = vmatprep.subr.mxu0 0.0
    %247 = vmatpush2.msra.mxu0 0.0
    %248 = vmatprep.subr.mxu0 0.0
    %249 = vmatpush2.msra.mxu0 0.0
    %250 = vmatprep.subr.mxu0 0.0
    %251 = vmatpush2.msra.mxu0 0.0
    %252 = vmatprep.subr.mxu0 0.0
    %253 = vmatpush2.msra.mxu0 0.0
    %254 = vmatprep.subr.mxu0 0.0
    %255 = vmatpush2.msra.mxu0 0.0
    %256 = vmatprep.subr.mxu0 0.0
    %257 = vmatpush2.msra.mxu0 0.0
    %258 = vmatprep.mubr.f32.mxu0 0.0
    %259 = vmatmul.mubr.f32.gmra.mxu0 %v177
    %v260 = vpop.f32.mrf.mxu0
    %v261 = vadd.f32 0.0, %v260
    %v262 = vpop.f32.mrf.mxu0
    %263 = vdwg.mxu0
    %v264 = vrot.slane %v261, 4
    %v265 = vadd.f32 %v261, %v264
    %v266 = vrot.slane %v265, 2
    %v267 = vadd.f32 %v265, %v266
    %v268 = vrot.slane %v267, 1
    %v269 = vadd.f32 %v267, %v268
    %v270 = vmul.f32 %v269, %v149
    %v271 = vsub.f32 %v261, %v270
    %v272 = vmul.f32 %v271, %v271
    %v273 = vrot.slane %v272, 4
    %v274 = vadd.f32 %v272, %v273
    %v275 = vrot.slane %v274, 2
    %v276 = vadd.f32 %v274, %v275
    %v277 = vrot.slane %v276, 1
    %v278 = vadd.f32 %v276, %v277
    %v279 = vmul.f32 %v278, %v149
    %v280 = vld [vmem:[%s4 + $0x2] sm:$0x1]
    %v281 = vadd.f32 %v279, 1e-05
    %v282 = vrsqrt.pop %v281
    %v283 = vmul.f32 %v280, %v282
    %v284 = vlaneseq
    %v285 = vshrl.u32 %v284, 7
    %v286 = vsub.s32 0, %v285
    %v287 = vrot.slane %v283, %v286
    %v288 = vmul.f32 %v261, %v287
    %v289 = vld [vmem:[%s4 + $0x3] sm:$0x1]
    %v290 = vmul.f32 %v270, %v283
    %v291 = vsub.f32 %v289, %v290
    %v292 = vlaneseq
    %v293 = vshrl.u32 %v292, 7
    %v294 = vsub.s32 0, %v293
    %v295 = vrot.slane %v291, %v294
    %v296 = vadd.f32 %v288, %v295
    %v297 = vmax.f32 %v296, 0.0
    %v298 = vld [vmem:[%s4 + $0x4] sm:$0x1]
    %v299 = vld [vmem:[%s4 + $0x5] sm:$0x1]
    %v300 = vlaneseq
    %v301 = vshrl.u32 %v300, 7
    %v302 = vsub.s32 0, %v301
    %v303 = vrot.slane %v298, %v302
    %v304 = vmul.f32 %v297, %v303
    %305 = vadd.xlane.f32.xlu0 %v304
    %v306 = vpop.xlane.xlu0 %305
    %v307 = vlaneseq
    %v308 = vshrl.u32 %v307, 7
    %v309 = vsub.s32 0, %v308
    %v310 = vrot.slane %v299, %v309
    %v311 = vadd.f32 %v306, %v310
    %vm312 = vcmask 7168
    %313 = vst.msk [vmem:[%s5] sm:$0xff] %vm312, %v311
    // Predicated region
    $region30: #{tpu_custom_call.1} parent=1 // pred_check
      _
    $region31: #{tpu_custom_call.1} parent=1 // pred_check_branch
      %315 = sbr.rel (0) target = $region33
    $region32: #{tpu_custom_call.1} parent=1 // pred_region
      _
    $region33: #{tpu_custom_call.1} parent=1 // pred_fallthru
      _
    // Predicated region
    $region34: #{tpu_custom_call.1} parent=1 // pred_check
      _
    $region35: #{tpu_custom_call.1} parent=1 // pred_check_branch
      %317 = sbr.rel (0) target = $region37
    $region36: #{tpu_custom_call.1} parent=1 // pred_region
      _
    $region37: #{tpu_custom_call.1} parent=1 // pred_fallthru
      _
    %318 = vsyncpa [#allocation3], 1
    %319 = vsyncpa [#allocation5], 1

</llo_original>
